<compile_context>
chip_gen: v6e
topology: v6e:2x2x1
jax: 0.10.0
libtpu: 0.0.40
codegen_flags: <defaults>
</compile_context>

<pallas_src>
import numpy as np
import jax
import jax.numpy as jnp
from jax.experimental import pallas as pl
from jax.experimental.pallas import tpu as pltpu


# ----------------------------------------------------------------------------
# ConvTranspose3d, kernel_size=2, stride=2  (one fused MXU dot per (n, d))
# ----------------------------------------------------------------------------
def _convt_k2s2_kernel(x_ref, w_ref, b_ref, o_ref):
    # x_ref: (1, 1, H, W, Cin)   w_ref: (Cin, 8*Cout), columns ordered (a,b,c,co)
    # b_ref: (1, 8*Cout)         o_ref: (1, 1, H*W, 8*Cout)
    H, W, Cin = x_ref.shape[2], x_ref.shape[3], x_ref.shape[4]
    x = x_ref[0, 0].reshape(H * W, Cin)          # leading-dim merge (cheap)
    y = jnp.dot(x, w_ref[...], preferred_element_type=jnp.float32) + b_ref[...]
    o_ref[0, 0] = y


def conv_transpose3d_k2s2(x, w, b):
    # x: (N, D, H, W, Cin) ; w: torch layout (Cin, Cout, 2, 2, 2) ; b: (Cout,)
    N, D, H, W, Cin = x.shape
    Cout = w.shape[1]
    # (Cin, a, b, c, Cout) -> (Cin, 8*Cout): one MXU push instead of eight.
    wf = jnp.transpose(w, (0, 2, 3, 4, 1)).reshape(Cin, 8 * Cout)
    bf = jnp.tile(b, 8).reshape(1, 8 * Cout)
    slab = pl.pallas_call(
        _convt_k2s2_kernel,
        out_shape=jax.ShapeDtypeStruct((N, D, H * W, 8 * Cout), jnp.float32),
        grid=(N, D),
        in_specs=[
            pl.BlockSpec((1, 1, H, W, Cin), lambda n, d: (n, d, 0, 0, 0)),
            pl.BlockSpec((Cin, 8 * Cout), lambda n, d: (0, 0)),
            pl.BlockSpec((1, 8 * Cout), lambda n, d: (0, 0)),
        ],
        out_specs=pl.BlockSpec((1, 1, H * W, 8 * Cout),
                               lambda n, d: (n, d, 0, 0)),
        compiler_params=pltpu.CompilerParams(
            dimension_semantics=("parallel", "parallel")),
    )(x, wf, bf)
    # Interleave the (a, b, c) offsets into (N, 2D, 2H, 2W, Cout).  Kept in XLA,
    # where it fuses with the downstream pad + concat into a single pass.
    out = slab.reshape(N, D, H, W, 2, 2, 2, Cout)
    out = jnp.transpose(out, (0, 1, 4, 2, 5, 3, 6, 7))
    return out.reshape(N, 2 * D, 2 * H, 2 * W, Cout)


# ----------------------------------------------------------------------------
# Conv3d (k=3, s=1, p=1) fused with BatchNorm batch-statistics accumulation.
# Streams three depth-shifted (H+2, W+2, Cin) planes per (n, d) grid step.
# ----------------------------------------------------------------------------
def _conv3d_3x3_bnstats_kernel(x0_ref, x1_ref, x2_ref, w_ref, b_ref,
                               o_ref, sum_ref, sq_ref):
    # xk_ref : (1, 1, H+2, W+2, Cin)  -- depth plane (d + k) of the padded input
    # w_ref  : (3, 3, 3, Cin, Cout)   b_ref: (1, Cout)
    # o_ref  : (1, 1, H*W, Cout)
    # sum_ref/sq_ref: (1, Cout) per-channel accumulators resident across the grid
    Cin = x0_ref.shape[4]
    HW, Cout = o_ref.shape[2], o_ref.shape[3]
    H = x0_ref.shape[2] - 2
    W = x0_ref.shape[3] - 2

    @pl.when(jnp.logical_and(pl.program_id(0) == 0, pl.program_id(1) == 0))
    def _():
        sum_ref[...] = jnp.zeros_like(sum_ref)
        sq_ref[...] = jnp.zeros_like(sq_ref)

    planes = (x0_ref, x1_ref, x2_ref)
    acc = None
    for kd in range(3):
        for kh in range(3):
            for kw in range(3):
                patch = planes[kd][0, 0, pl.ds(kh, H), pl.ds(kw, W), :]
                part = jnp.dot(patch.reshape(HW, Cin), w_ref[kd, kh, kw],
                               preferred_element_type=jnp.float32)
                acc = part if acc is None else acc + part
    y = acc + b_ref[...]                       # single bias add
    o_ref[0, 0] = y
    # Fused BN statistics: reuse y while it is still in VMEM (saves one full
    # HBM read of the conv output per DoubleConv stage).
    sum_ref[...] += jnp.sum(y, axis=0, keepdims=True)
    sq_ref[...] += jnp.sum(y * y, axis=0, keepdims=True)
    # TODO(synk): im2col along kw/kh (channel-axis concat -> K=3*Cin..27*Cin)
    # would cut MXU issue count up to 27x, and a (H, W*Cout) flattened store
    # would make the output fully lane-dense; both need unaligned minor-dim
    # concat / minor-changing reshapes kept off this known-good lowering path.
    # TODO(synk): tile H*W (and flip acc orientation) for large spatial planes
    # so the accumulator stays within the 64-vreg budget.


def conv3d_3x3_bnstats(x, w, b):
    # x: (N, D, H, W, Cin) ; w: torch layout (Cout, Cin, 3, 3, 3) ; b: (Cout,)
    # Returns conv output (N, D, H*W, Cout) plus per-channel sum / sum-of-sq.
    N, D, H, W, Cin = x.shape
    Cout = w.shape[0]
    xp = jnp.pad(x, ((0, 0), (1, 1), (1, 1), (1, 1), (0, 0)))
    wk = jnp.transpose(w, (2, 3, 4, 1, 0))  # (3,3,3,Cin,Cout)
    bk = b.reshape(1, Cout)
    return pl.pallas_call(
        _conv3d_3x3_bnstats_kernel,
        out_shape=(jax.ShapeDtypeStruct((N, D, H * W, Cout), jnp.float32),
                   jax.ShapeDtypeStruct((1, Cout), jnp.float32),
                   jax.ShapeDtypeStruct((1, Cout), jnp.float32)),
        grid=(N, D),
        in_specs=[
            # Three depth-shifted views of the same padded array: only three
            # (H+2, W+2, Cin) slabs live in VMEM per step instead of the whole
            # (D+2) volume (halo-blocking along D without manual DMA).
            pl.BlockSpec((1, 1, H + 2, W + 2, Cin),
                         lambda n, d: (n, d, 0, 0, 0)),
            pl.BlockSpec((1, 1, H + 2, W + 2, Cin),
                         lambda n, d: (n, d + 1, 0, 0, 0)),
            pl.BlockSpec((1, 1, H + 2, W + 2, Cin),
                         lambda n, d: (n, d + 2, 0, 0, 0)),
            pl.BlockSpec((3, 3, 3, Cin, Cout), lambda n, d: (0, 0, 0, 0, 0)),
            pl.BlockSpec((1, Cout), lambda n, d: (0, 0)),
        ],
        out_specs=(
            pl.BlockSpec((1, 1, H * W, Cout), lambda n, d: (n, d, 0, 0)),
            pl.BlockSpec((1, Cout), lambda n, d: (0, 0)),   # resident accumulator
            pl.BlockSpec((1, Cout), lambda n, d: (0, 0)),   # resident accumulator
        ),
        # Both axes "arbitrary": the (1, Cout) stat accumulators are resident
        # across the whole grid, so no grid axis may be core-split.
        compiler_params=pltpu.CompilerParams(
            dimension_semantics=("arbitrary", "arbitrary")),
    )(xp, xp, xp, wk, bk)   # -> (y, sum, sumsq)


# ----------------------------------------------------------------------------
# BatchNorm3d (training mode: batch statistics) + ReLU, single streaming apply
# (statistics were already accumulated inside the conv kernel)
# ----------------------------------------------------------------------------
def _bn_apply_kernel(x_ref, sc_ref, sh_ref, o_ref):
    # x_ref/o_ref: (1, H, W*C) (lane-dense) ; sc_ref/sh_ref: (1, W*C)
    o_ref[0] = jnp.maximum(x_ref[0] * sc_ref[...] + sh_ref[...], 0.0)


def bn_relu_apply(y, s, sq, gamma, beta, shape):
    # y: (N, D, H*W, C) conv output ; s / sq: (1, C) batch sum / sum-of-squares
    # Training-mode BatchNorm3d (biased batch variance, eps=1e-5) + ReLU.
    N, D, H, W, C = shape
    cnt = float(N * D * H * W)

    mean = s[0] / cnt
    var = sq[0] / cnt - mean * mean          # biased variance (torch training BN)
    scale = gamma * jax.lax.rsqrt(var + 1e-5)
    shift = beta - mean * scale
    sc_row = jnp.tile(scale, W).reshape(1, W * C)   # (w, c)-ordered lane row
    sh_row = jnp.tile(shift, W).reshape(1, W * C)

    # normalize + ReLU on lane-dense (H, W*C) tiles
    out = pl.pallas_call(
        _bn_apply_kernel,
        out_shape=jax.ShapeDtypeStruct((N * D, H, W * C), jnp.float32),
        grid=(N * D,),
        in_specs=[pl.BlockSpec((1, H, W * C), lambda t: (t, 0, 0)),
                  pl.BlockSpec((1, W * C), lambda t: (0, 0)),
                  pl.BlockSpec((1, W * C), lambda t: (0, 0))],
        out_specs=pl.BlockSpec((1, H, W * C), lambda t: (t, 0, 0)),
        compiler_params=pltpu.CompilerParams(
            dimension_semantics=("parallel",)),
    )(y.reshape(N * D, H, W * C), sc_row, sh_row)
    # TODO(synk): running-mean/var buffer updates (training side effect) are
    # not modeled; forward output does not depend on them.  The apply pass
    # could additionally write a pre-padded (D+2, H+2, W+2) tensor to elide
    # the XLA spatial pad before the next conv (one HBM copy).
    return out.reshape(N, D, H, W, C)


# ----------------------------------------------------------------------------
# UpP forward (wrapper)
# ----------------------------------------------------------------------------
def upp_forward(x1, x2, x3, p):
    # Inputs are PyTorch NCDHW; convert to NDHWC for the kernels.
    to_ndhwc = lambda t: jnp.transpose(t, (0, 2, 3, 4, 1))
    x1c, x2c, x3c = to_ndhwc(x1), to_ndhwc(x2), to_ndhwc(x3)

    x1u = conv_transpose3d_k2s2(x1c, p["up_w"], p["up_b"])

    def pad_to(x, tgt):  # F.pad semantics: floor(diff/2) on the low side
        dZ = tgt.shape[1] - x.shape[1]
        dY = tgt.shape[2] - x.shape[2]
        dX = tgt.shape[3] - x.shape[3]
        return jnp.pad(x, ((0, 0),
                           (dZ // 2, dZ - dZ // 2),
                           (dY // 2, dY - dY // 2),
                           (dX // 2, dX - dX // 2),
                           (0, 0)))

    # TODO(synk): pad_to assumes the skip tensor is at least as large as the
    # source in every spatial dim (no negative-pad cropping).
    x1u = pad_to(x1u, x3c)
    x2p = pad_to(x2c, x3c)
    xcat = jnp.concatenate([x3c, x2p, x1u], axis=-1)
    # TODO(synk): feeding conv1 three separate refs (x3/x2/x1u) with per-source
    # weight slices would remove this concat's HBM round trip entirely.

    N, D, H, W, _ = x3c.shape
    Cout = p["c1_w"].shape[0]

    y, s, sq = conv3d_3x3_bnstats(xcat, p["c1_w"], p["c1_b"])
    y = bn_relu_apply(y, s, sq, p["bn1_g"], p["bn1_b"], (N, D, H, W, Cout))
    y, s, sq = conv3d_3x3_bnstats(y, p["c2_w"], p["c2_b"])
    y = bn_relu_apply(y, s, sq, p["bn2_g"], p["bn2_b"], (N, D, H, W, Cout))

    return jnp.transpose(y, (0, 4, 1, 2, 3))  # back to NCDHW


# ----------------------------------------------------------------------------
# Pure-JAX reference (NCDHW, mirrors the PyTorch module)
# ----------------------------------------------------------------------------
def ref_forward(x1, x2, x3, p):
    N, Ci, D, H, W = x1.shape
    Co = p["up_w"].shape[1]
    up = jnp.einsum("nidhw,ioabc->nodahbwc", x1, p["up_w"])
    up = up.reshape(N, Co, 2 * D, 2 * H, 2 * W) + p["up_b"].reshape(1, Co, 1, 1, 1)

    def pad_to(x, tgt):
        dZ = tgt.shape[2] - x.shape[2]
        dY = tgt.shape[3] - x.shape[3]
        dX = tgt.shape[4] - x.shape[4]
        return jnp.pad(x, ((0, 0), (0, 0),
                           (dZ // 2, dZ - dZ // 2),
                           (dY // 2, dY - dY // 2),
                           (dX // 2, dX - dX // 2)))

    x2p = pad_to(x2, x3)
    upp = pad_to(up, x3)
    x = jnp.concatenate([x3, x2p, upp], axis=1)

    def conv(x, w, b):
        y = jax.lax.conv_general_dilated(
            x, w, (1, 1, 1), [(1, 1)] * 3,
            dimension_numbers=("NCDHW", "OIDHW", "NCDHW"))
        return y + b.reshape(1, -1, 1, 1, 1)

    def bnr(x, g, bt):
        m = jnp.mean(x, axis=(0, 2, 3, 4), keepdims=True)
        v = jnp.mean((x - m) ** 2, axis=(0, 2, 3, 4), keepdims=True)
        y = (x - m) * jax.lax.rsqrt(v + 1e-5) * g.reshape(1, -1, 1, 1, 1) \
            + bt.reshape(1, -1, 1, 1, 1)
        return jnp.maximum(y, 0.0)

    y = bnr(conv(x, p["c1_w"], p["c1_b"]), p["bn1_g"], p["bn1_b"])
    y = bnr(conv(y, p["c2_w"], p["c2_b"]), p["bn2_g"], p["bn2_b"])
    return y


# ----------------------------------------------------------------------------
if __name__ == "__main__":
    key = jax.random.PRNGKey(0)
    keys = jax.random.split(key, 16)

    N, Cin, Cout = 2, 8, 4
    # x1 small volume (upsampled 2x), x2 slightly smaller than x3 to exercise pad
    x1 = jax.random.normal(keys[0], (N, Cin, 4, 4, 4), jnp.float32)
    x2 = jax.random.normal(keys[1], (N, Cout, 7, 7, 7), jnp.float32)
    x3 = jax.random.normal(keys[2], (N, Cout, 8, 8, 8), jnp.float32)

    params = {
        # ConvTranspose3d(in=Cin, out=Cout, k=2, s=2): weight (Cin, Cout, 2,2,2)
        "up_w": 0.1 * jax.random.normal(keys[3], (Cin, Cout, 2, 2, 2), jnp.float32),
        "up_b": 0.05 * jax.random.normal(keys[4], (Cout,), jnp.float32),
        # DoubleConv: Conv3d(3*Cout -> Cout, k=3, p=1)
        "c1_w": 0.1 * jax.random.normal(keys[5], (Cout, 3 * Cout, 3, 3, 3), jnp.float32),
        "c1_b": 0.05 * jax.random.normal(keys[6], (Cout,), jnp.float32),
        "bn1_g": 1.0 + 0.1 * jax.random.normal(keys[7], (Cout,), jnp.float32),
        "bn1_b": 0.1 * jax.random.normal(keys[8], (Cout,), jnp.float32),
        # Conv3d(Cout -> Cout, k=3, p=1)
        "c2_w": 0.1 * jax.random.normal(keys[9], (Cout, Cout, 3, 3, 3), jnp.float32),
        "c2_b": 0.05 * jax.random.normal(keys[10], (Cout,), jnp.float32),
        "bn2_g": 1.0 + 0.1 * jax.random.normal(keys[11], (Cout,), jnp.float32),
        "bn2_b": 0.1 * jax.random.normal(keys[12], (Cout,), jnp.float32),
    }

    out = jax.block_until_ready(upp_forward(x1, x2, x3, params))
    ref = jax.block_until_ready(ref_forward(x1, x2, x3, params))

    assert out.shape == (N, Cout, 8, 8, 8), out.shape
    np.testing.assert_allclose(np.asarray(out), np.asarray(ref),
                               rtol=2e-2, atol=2e-2)
    print("KERNEL_OK")
</pallas_src>

<mosaic_0001>
module attributes {stable_mosaic.version = 11 : i64} {
  func.func @_convt_k2s2_kernel(%arg0: i32, %arg1: i32, %arg2: memref<1x1x4x4x8xf32, #tpu.memory_space<vmem>>, %arg3: memref<8x32xf32, #tpu.memory_space<vmem>>, %arg4: memref<1x32xf32, #tpu.memory_space<vmem>>, %arg5: memref<1x1x16x32xf32, #tpu.memory_space<vmem>>) attributes {dimension_semantics = [#tpu.dimension_semantics<parallel>, #tpu.dimension_semantics<parallel>], iteration_bounds = array<i64: 2, 4>, scalar_prefetch = 0 : i64, scratch_operands = 0 : i64, tpu.core_type = #tpu.core_type<tc>, window_params = [{transform_indices = @transform_0, window_bounds = array<i64: 1, 1, 4, 4, 8>}, {pipeline_mode = #tpu.pipeline_mode<synchronous>, transform_indices = @transform_1, window_bounds = array<i64: 8, 32>}, {pipeline_mode = #tpu.pipeline_mode<synchronous>, transform_indices = @transform_2, window_bounds = array<i64: 1, 32>}, {transform_indices = @transform_3, window_bounds = array<i64: 1, 1, 16, 32>}]} {
    %c0 = arith.constant 0 : index
    %c0_0 = arith.constant 0 : index
    %c0_1 = arith.constant 0 : index
    %c0_2 = arith.constant 0 : index
    %c0_3 = arith.constant 0 : index
    %0 = vector.load %arg2[%c0, %c0_0, %c0_1, %c0_2, %c0_3] : memref<1x1x4x4x8xf32, #tpu.memory_space<vmem>>, vector<1x1x4x4x8xf32>
    %1 = vector.shape_cast %0 : vector<1x1x4x4x8xf32> to vector<4x4x8xf32>
    %2 = vector.shape_cast %1 : vector<4x4x8xf32> to vector<16x8xf32>
    %c0_4 = arith.constant 0 : index
    %c0_5 = arith.constant 0 : index
    %3 = vector.load %arg3[%c0_4, %c0_5] : memref<8x32xf32, #tpu.memory_space<vmem>>, vector<8x32xf32>
    %cst = arith.constant dense<0.000000e+00> : vector<16x32xf32>
    %4 = tpu.matmul %2, %3, %cst {dimension_numbers = #tpu.dot_dimension_numbers<[1], [0], [0], [1], [0, 0, 1, 1], [], []>} : vector<16x8xf32>, vector<8x32xf32>, vector<16x32xf32> -> vector<16x32xf32>
    %c0_6 = arith.constant 0 : index
    %c0_7 = arith.constant 0 : index
    %5 = vector.load %arg4[%c0_6, %c0_7] : memref<1x32xf32, #tpu.memory_space<vmem>>, vector<1x32xf32>
    %6 = vector.broadcast %5 : vector<1x32xf32> to vector<16x32xf32>
    %7 = arith.addf %4, %6 : vector<16x32xf32>
    %c0_8 = arith.constant 0 : index
    %c0_9 = arith.constant 0 : index
    %c0_10 = arith.constant 0 : index
    %c0_11 = arith.constant 0 : index
    %8 = vector.load %arg5[%c0_8, %c0_9, %c0_10, %c0_11] : memref<1x1x16x32xf32, #tpu.memory_space<vmem>>, vector<1x1x16x32xf32>
    %9 = vector.shape_cast %8 : vector<1x1x16x32xf32> to vector<16x32xf32>
    %10 = vector.shape_cast %7 : vector<16x32xf32> to vector<1x1x16x32xf32>
    tpu.vector_store %arg5[%c0_8, %c0_9, %c0_10, %c0_11], %10 {strides = array<i32>} : memref<1x1x16x32xf32, #tpu.memory_space<vmem>>, vector<1x1x16x32xf32>,
    return
  }
  func.func @transform_0(%arg0: i32, %arg1: i32) -> (i32, i32, i32, i32, i32) {
    %c0_i32 = arith.constant 0 : i32
    %c0_i32_0 = arith.constant 0 : i32
    %c0_i32_1 = arith.constant 0 : i32
    %c0_i32_2 = arith.constant 0 : i32
    return %arg0, %arg1, %c0_i32, %c0_i32_0, %c0_i32_1 : i32, i32, i32, i32, i32
  }
  func.func @transform_1(%arg0: i32, %arg1: i32) -> (i32, i32) {
    %c0_i32 = arith.constant 0 : i32
    %c0_i32_0 = arith.constant 0 : i32
    %c0_i32_1 = arith.constant 0 : i32
    return %c0_i32, %c0_i32_0 : i32, i32
  }
  func.func @transform_2(%arg0: i32, %arg1: i32) -> (i32, i32) {
    %c0_i32 = arith.constant 0 : i32
    %c0_i32_0 = arith.constant 0 : i32
    %c0_i32_1 = arith.constant 0 : i32
    return %c0_i32, %c0_i32_0 : i32, i32
  }
  func.func @transform_3(%arg0: i32, %arg1: i32) -> (i32, i32, i32, i32) {
    %c0_i32 = arith.constant 0 : i32
    %c0_i32_0 = arith.constant 0 : i32
    %c0_i32_1 = arith.constant 0 : i32
    return %arg0, %arg1, %c0_i32, %c0_i32_0 : i32, i32, i32, i32
  }
}

</mosaic_0001>

<llo_original>
// kernel: tpu_custom_call.1
$region0: #{tpu_custom_call.1}
  #allocation0 [shape = 'u32[]', space=smem, size = 0x4, offset = 0x4, fixed_abs, tag = 'smem constant byte address 0x4 - core index']
  #allocation1 [shape = 'u32[144,128]{1,0:T(1,128)}', space=vmem, size = 0x12000, scoped, tag = 'internal scratch']
  %s0 = inlined_call_operand.hbm [shape: f32[2,4,4,4,8], index: 0, kind: input, shape index: {}]
  %s1 = inlined_call_operand.hbm [shape: f32[8,32], index: 1, kind: input, shape index: {}]
  %s2 = inlined_call_operand.vmem [shape: f32[1,32], index: 2, kind: input, shape index: {}]
  %s3 = inlined_call_operand.hbm [shape: f32[2,4,16,32], index: 3, kind: output, shape index: {}]
  %s4 = sld [smem:[#allocation0]]
  $region53: #{tpu_custom_call.1} parent=0
    _
  %s6 = ssub.s32 1, %s4
  %s7 = scalar_select 0, %s6, %s4
  $region1: #{tpu_custom_call.1} parent=0
    #allocation2 [shape = 'u8[16384]{0}', space=vmem, size = 0x4000, scoped, tag = 'input window, operand 0']
    #allocation3 [shape = 's32[2]{0}', space=sflag, size = 0x8, scoped, tag = 'scoped memory for tpu_custom_call.1']
    #allocation4 [shape = 's32[2]{0}', space=sflag, size = 0x8, scoped, tag = 'scoped memory for tpu_custom_call.1']
    #allocation5 [shape = 'u8[4096]{0}', space=vmem, size = 0x1000, scoped, tag = 'input window, operand 1, single buffered']
    #allocation6 [shape = 's32[1]{0}', space=sflag, size = 0x4, scoped, tag = 'scoped memory for tpu_custom_call.1']
    #allocation7 [shape = 'u8[16384]{0}', space=vmem, size = 0x4000, scoped, tag = 'output window, operand 0']
    %8 = vsyncpa [#allocation3], 0
    %s9 = scalar_lea.sflag [#allocation3], 1
    %10 = vsyncpa %s9, 0
    %11 = vsyncpa [#allocation6], 0
    %12 = vsyncpa [#allocation4], 0
    %s13 = scalar_lea.sflag [#allocation4], 1
    %14 = vsyncpa %s13, 0
    loop: start=0, step=1, limit=10
    $region2: #{tpu_custom_call.1} parent=1 // loop_pre_header
      _
    $region3: #{tpu_custom_call.1} parent=1 // loop_header
      %s16 = sphi 0, %s20
      %p17 = scmp.ge.s32.totalorder %s16, 10
      %s23 = sphi 0, %s35
      %s24 = sphi 0, %s31
      %s25 = sphi 0, %s23
      %s26 = sphi 0, %s24
      %s27 = sphi 0, %s25
      %s28 = sphi 0, %s26
      %s40 = sphi 0, %s42
      %s43 = sphi 0, %s40
      %s44 = sphi 0, %s43
      %s60 = sphi 0, %s44
      %s64 = sphi 0, %s64
      %s66 = sphi 0, %s64
      %s67 = sphi 0, %s66
      %s81 = sphi 0, %s67
      %s85 = sphi 0, %s85
      %s87 = sphi 0, %s85
      %s88 = sphi 0, %s87
      %s102 = sphi 0, %s88
      %s110 = sphi 0, %s112
      %s113 = sphi 0, %s110
      %s114 = sphi 0, %s113
      %s130 = sphi 0, %s114
    $region4: #{tpu_custom_call.1} parent=1 // loop_header_branch
      %19 = sbr.rel (%p17) target = $region8
    $region5: #{tpu_custom_call.1} parent=1 // loop_body
      %s21 = ssub.s32 %s16, 1
      %s22 = ssub.s32 %s16, 2
      %s29 = sadd.s32 1, %s24
      %p30 = scmp.ge.s32.totalorder %s29, 4
      %s31 = scalar_select %p30, 0, %s29
      %s32 = sadd.s32 1, %s23
      %s33 = scalar_select %p30, %s32, %s23
      %p34 = scmp.ge.s32.totalorder %s33, 2
      %s35 = scalar_select %p34, 0, %s33
      %s36 = ssub.s32 %s23, %s35
      %s37 = ssub.s32 %s24, %s31
      %s38 = sor.u32 %s36, %s37
      %p39 = scmp.eq.s32.totalorder %s38, 0
      %s41 = sadd.s32 %s40, 1
      %s42 = scalar_select %p39, %s40, %s41
      %p45 = pneg %p39
      %p46 = scmp.eq.s32.totalorder %s16, 7
      %p47 = por %p45, %p46
      %p48 = scmp.ne.s32.totalorder %s40, %s43
      %p49 = scmp.eq.s32.totalorder %s16, 0
      %p50 = por %p48, %p49
      %p51 = scmp.ne.s32.totalorder %s40, %s43
      %p52 = scmp.eq.s32.totalorder %s21, 7
      %p53 = por %p51, %p52
      %p54 = scmp.ne.s32.totalorder %s43, %s44
      %p55 = scmp.eq.s32.totalorder %s21, 0
      %p56 = por %p54, %p55
      %p57 = scmp.ne.s32.totalorder %s43, %s44
      %p58 = scmp.eq.s32.totalorder %s22, 7
      %p59 = por %p57, %p58
      %p61 = scmp.ne.s32.totalorder %s44, %s60
      %p62 = scmp.eq.s32.totalorder %s22, 0
      %p63 = por %p61, %p62
      %s65 = sadd.s32 %s64, 1
      %p68 = scmp.eq.s32.totalorder %s16, 7
      %p69 = scmp.ne.s32.totalorder %s64, %s66
      %p70 = scmp.eq.s32.totalorder %s16, 0
      %p71 = por %p69, %p70
      %p72 = scmp.ne.s32.totalorder %s64, %s66
      %p73 = scmp.eq.s32.totalorder %s21, 7
      %p74 = por %p72, %p73
      %p75 = scmp.ne.s32.totalorder %s66, %s67
      %p76 = scmp.eq.s32.totalorder %s21, 0
      %p77 = por %p75, %p76
      %p78 = scmp.ne.s32.totalorder %s66, %s67
      %p79 = scmp.eq.s32.totalorder %s22, 7
      %p80 = por %p78, %p79
      %p82 = scmp.ne.s32.totalorder %s67, %s81
      %p83 = scmp.eq.s32.totalorder %s22, 0
      %p84 = por %p82, %p83
      %s86 = sadd.s32 %s85, 1
      %p89 = scmp.eq.s32.totalorder %s16, 7
      %p90 = scmp.ne.s32.totalorder %s85, %s87
      %p91 = scmp.eq.s32.totalorder %s16, 0
      %p92 = por %p90, %p91
      %p93 = scmp.ne.s32.totalorder %s85, %s87
      %p94 = scmp.eq.s32.totalorder %s21, 7
      %p95 = por %p93, %p94
      %p96 = scmp.ne.s32.totalorder %s87, %s88
      %p97 = scmp.eq.s32.totalorder %s21, 0
      %p98 = por %p96, %p97
      %p99 = scmp.ne.s32.totalorder %s87, %s88
      %p100 = scmp.eq.s32.totalorder %s22, 7
      %p101 = por %p99, %p100
      %p103 = scmp.ne.s32.totalorder %s88, %s102
      %p104 = scmp.eq.s32.totalorder %s22, 0
      %p105 = por %p103, %p104
      %s106 = ssub.s32 %s23, %s35
      %s107 = ssub.s32 %s24, %s31
      %s108 = sor.u32 %s106, %s107
      %p109 = scmp.eq.s32.totalorder %s108, 0
      %s111 = sadd.s32 %s110, 1
      %s112 = scalar_select %p109, %s110, %s111
      %p115 = pneg %p109
      %p116 = scmp.eq.s32.totalorder %s16, 7
      %p117 = por %p115, %p116
      %p118 = scmp.ne.s32.totalorder %s110, %s113
      %p119 = scmp.eq.s32.totalorder %s16, 0
      %p120 = por %p118, %p119
      %p121 = scmp.ne.s32.totalorder %s110, %s113
      %p122 = scmp.eq.s32.totalorder %s21, 7
      %p123 = por %p121, %p122
      %p124 = scmp.ne.s32.totalorder %s113, %s114
      %p125 = scmp.eq.s32.totalorder %s21, 0
      %p126 = por %p124, %p125
      %p127 = scmp.ne.s32.totalorder %s113, %s114
      %p128 = scmp.eq.s32.totalorder %s22, 7
      %p129 = por %p127, %p128
      %p131 = scmp.ne.s32.totalorder %s114, %s130
      %p132 = scmp.eq.s32.totalorder %s22, 0
      %p133 = por %p131, %p132
      %p134 = scmp.le.s32.totalorder 1, %s16
      %p135 = scmp.lt.s32.totalorder %s16, 9
      %p136 = pnand %p134, %p135
      %p137 = pneg %p136
      // Predicated region
      $region9: #{tpu_custom_call.1} parent=5 // pred_check
        _
      $region10: #{tpu_custom_call.1} parent=5 // pred_check_branch
        %139 = sbr.rel (%p136) target = $region12
      $region11: #{tpu_custom_call.1} parent=5 // pred_region
        %s140 = ssub.s32 %s16, 1
        // Predicated region
        $region13: #{tpu_custom_call.1} parent=11 // pred_check
          %p141 = pneg %p77
        $region14: #{tpu_custom_call.1} parent=11 // pred_check_branch
          %143 = sbr.rel (%p141) target = $region16
        $region15: #{tpu_custom_call.1} parent=11 // pred_region
          %s145 = ssub.s32 128, 128
          %146 = vsyncadd [#allocation6], %s145
          %s148 = sshll.u32 [#allocation5], 4
          %s149 = int_to_ptr.vmem [resolvable:$true] %s148
          %151 = dma.hbm_to_vmem [thread:$0]  %s1, 128, %s149, [#allocation6]
        $region16: #{tpu_custom_call.1} parent=11 // pred_fallthru
          _
        // Predicated region
        $region17: #{tpu_custom_call.1} parent=11 // pred_check
          %p152 = pneg %p98
        $region18: #{tpu_custom_call.1} parent=11 // pred_check_branch
          %154 = sbr.rel (%p152) target = $region20
        $region19: #{tpu_custom_call.1} parent=11 // pred_region
          _
        $region20: #{tpu_custom_call.1} parent=11 // pred_fallthru
          _
      $region12: #{tpu_custom_call.1} parent=5 // pred_fallthru
        _
      %p155 = scmp.lt.s32.totalorder %s16, 8
      // Predicated region
      $region21: #{tpu_custom_call.1} parent=5 // pred_check
        %p156 = pneg %p155
      $region22: #{tpu_custom_call.1} parent=5 // pred_check_branch
        %158 = sbr.rel (%p156) target = $region24
      $region23: #{tpu_custom_call.1} parent=5 // pred_region
        // Predicated region
        $region25: #{tpu_custom_call.1} parent=23 // pred_check
          %p159 = pneg %p50
        $region26: #{tpu_custom_call.1} parent=23 // pred_check_branch
          %161 = sbr.rel (%p159) target = $region28
        $region27: #{tpu_custom_call.1} parent=23 // pred_region
          %s162 = sand.u32 %s40, 1
          %s163 = scalar_lea.sflag [#allocation3], %s162
          %s164 = sand.u32 %s40, 1
          %s165 = smul.addr %s164, 16
          %s166 = scalar_lea.vmem [#allocation2], %s165
          %s168 = ssub.s32 256, 256
          %169 = vsyncadd %s163, %s168
          %s170 = smul.addr %s24, 4
          %s171 = smul.addr %s23, 16
          %s172 = sadd.s32 %s170, %s171
          %s173 = smul.addr %s172, 64
          %s174 = scalar_lea.hbm %s0, %s173
          %s175 = sshll.u32 %s166, 4
          %s176 = int_to_ptr.vmem [resolvable:$true] %s175
          %181 = dma.hbm_to_vmem [thread:$0]  %s174, 256, %s176, %s163, 64, 64, 4
        $region28: #{tpu_custom_call.1} parent=23 // pred_fallthru
          _
      $region24: #{tpu_custom_call.1} parent=5 // pred_fallthru
        _
      %p182 = scmp.le.s32.totalorder 1, %s16
      %p183 = scmp.lt.s32.totalorder %s16, 9
      %p184 = pnand %p182, %p183
      %p185 = pneg %p184
      // Predicated region
      $region29: #{tpu_custom_call.1} parent=5 // pred_check
        _
      $region30: #{tpu_custom_call.1} parent=5 // pred_check_branch
        %187 = sbr.rel (%p184) target = $region32
      $region31: #{tpu_custom_call.1} parent=5 // pred_region
        %s188 = ssub.s32 %s16, 1
        %s189 = sand.u32 %s43, 1
        %s190 = scalar_lea.sflag [#allocation3], %s189
        %s191 = sand.u32 %s43, 1
        %s192 = smul.addr %s191, 16
        %s193 = scalar_lea.vmem [#allocation2], %s192
        // Predicated region
        $region33: #{tpu_custom_call.1} parent=31 // pred_check
          %p194 = pneg %p56
        $region34: #{tpu_custom_call.1} parent=31 // pred_check_branch
          %196 = sbr.rel (%p194) target = $region36
        $region35: #{tpu_custom_call.1} parent=31 // pred_region
          %197 = dma.done %s190, 256
        $region36: #{tpu_custom_call.1} parent=31 // pred_fallthru
          _
        // Predicated region
        $region37: #{tpu_custom_call.1} parent=31 // pred_check
          %p198 = pneg %p77
        $region38: #{tpu_custom_call.1} parent=31 // pred_check_branch
          %200 = sbr.rel (%p198) target = $region40
        $region39: #{tpu_custom_call.1} parent=31 // pred_region
          %201 = dma.done [#allocation6], 128
        $region40: #{tpu_custom_call.1} parent=31 // pred_fallthru
          _
        %s202 = sand.u32 %s43, 1
        %s203 = scalar_lea.sflag [#allocation3], %s202
        %s204 = sand.u32 %s43, 1
        %s205 = smul.addr %s204, 16
        %s206 = scalar_lea.vmem [#allocation2], %s205
        %p207 = pneg %p56
        %p208 = pneg %p53
        %p209 = pneg %p77
        %p210 = pneg %p74
        %p211 = pneg %p98
        %p212 = pneg %p95
        %p213 = pneg %p126
        %p214 = pneg %p123
        %s215 = sand.u32 %s113, 1
        %s216 = scalar_lea.sflag [#allocation4], %s215
        %s217 = sand.u32 %s113, 1
        %s218 = smul.addr %s217, 16
        %s219 = scalar_lea.vmem [#allocation7], %s218
        %v220 = vld [vmem:[%s193] sm:$0xf]
        %v221 = vld [vmem:[%s193 + $0x4] sm:$0xf]
        %v222 = vld [vmem:[%s193 + $0x8] sm:$0xf]
        %v223 = vld [vmem:[%s193 + $0xc] sm:$0xf]
        %v224 = vld [vmem:[#allocation5] sm:$0xff]
        %v225 = vld [vmem:[%s2] sm:$0x1]
        %v227 = vlaneseq
        %v228 = vshrl.u32 %v227, 7
        %v229 = vsub.s32 0, %v228
        %v230 = vrot.slane %v225, %v229
        %v236 = vcombine.low %v220, %v221
        %v237 = vcombine.low %v222, %v223
        %vm238 = vcmask 64512
        %v239 = vsel %vm238, %v236, 0
        %v241 = vsel %vm238, %v237, 0
        %243 = vmatprep.subr.mxu0 0.0
        %244 = vmatpush1.msra.mxu0 0.0
        %245 = vmatprep.subr.mxu0 0.0
        %246 = vmatpush1.msra.mxu0 0.0
        %247 = vmatprep.subr.mxu0 0.0
        %248 = vmatpush1.msra.mxu0 0.0
        %249 = vmatprep.subr.mxu0 0.0
        %250 = vmatpush1.msra.mxu0 0.0
        %251 = vmatprep.subr.mxu0 0.0
        %252 = vmatpush1.msra.mxu0 0.0
        %253 = vmatprep.subr.mxu0 0.0
        %254 = vmatpush1.msra.mxu0 0.0
        %255 = vmatprep.subr.mxu0 0.0
        %256 = vmatpush1.msra.mxu0 0.0
        %257 = vmatprep.subr.mxu0 0.0
        %258 = vmatpush1.msra.mxu0 0.0
        %259 = vmatprep.subr.mxu0 0.0
        %260 = vmatpush1.msra.mxu0 0.0
        %261 = vmatprep.subr.mxu0 0.0
        %262 = vmatpush1.msra.mxu0 0.0
        %263 = vmatprep.subr.mxu0 0.0
        %264 = vmatpush1.msra.mxu0 0.0
        %265 = vmatprep.subr.mxu0 0.0
        %266 = vmatpush1.msra.mxu0 0.0
        %267 = vmatprep.subr.mxu0 0.0
        %268 = vmatpush1.msra.mxu0 0.0
        %269 = vmatprep.subr.mxu0 0.0
        %270 = vmatpush1.msra.mxu0 0.0
        %271 = vmatprep.subr.mxu0 0.0
        %272 = vmatpush1.msra.mxu0 0.0
        %273 = vmatprep.subr.mxu0 0.0
        %274 = vmatpush1.msra.mxu0 %v224
        %275 = vmatprep.subr.mxu0 0.0
        %276 = vmatpush2.msra.mxu0 0.0
        %277 = vmatprep.subr.mxu0 0.0
        %278 = vmatpush2.msra.mxu0 0.0
        %279 = vmatprep.subr.mxu0 0.0
        %280 = vmatpush2.msra.mxu0 0.0
        %281 = vmatprep.subr.mxu0 0.0
        %282 = vmatpush2.msra.mxu0 0.0
        %283 = vmatprep.subr.mxu0 0.0
        %284 = vmatpush2.msra.mxu0 0.0
        %285 = vmatprep.subr.mxu0 0.0
        %286 = vmatpush2.msra.mxu0 0.0
        %287 = vmatprep.subr.mxu0 0.0
        %288 = vmatpush2.msra.mxu0 0.0
        %289 = vmatprep.subr.mxu0 0.0
        %290 = vmatpush2.msra.mxu0 0.0
        %291 = vmatprep.subr.mxu0 0.0
        %292 = vmatpush2.msra.mxu0 0.0
        %293 = vmatprep.subr.mxu0 0.0
        %294 = vmatpush2.msra.mxu0 0.0
        %295 = vmatprep.subr.mxu0 0.0
        %296 = vmatpush2.msra.mxu0 0.0
        %297 = vmatprep.subr.mxu0 0.0
        %298 = vmatpush2.msra.mxu0 0.0
        %299 = vmatprep.subr.mxu0 0.0
        %300 = vmatpush2.msra.mxu0 0.0
        %301 = vmatprep.subr.mxu0 0.0
        %302 = vmatpush2.msra.mxu0 0.0
        %303 = vmatprep.subr.mxu0 0.0
        %304 = vmatpush2.msra.mxu0 0.0
        %305 = vmatprep.subr.mxu0 0.0
        %306 = vmatpush2.msra.mxu0 0.0
        %307 = vmatprep.mubr.f32.mxu0 0.0
        %308 = vmatmul.mubr.f32.gmra.mxu0 %v239
        %v309 = vpop.f32.mrf.mxu0
        %v310 = vadd.f32 %v230, %v309
        %v311 = vpop.f32.mrf.mxu0
        %312 = vmatprep.mubr.f32.mxu0 0.0
        %313 = vmatmul.mubr.f32.gmra.mxu0 %v241
        %v314 = vpop.f32.mrf.mxu0
        %v315 = vadd.f32 %v230, %v314
        %v316 = vpop.f32.mrf.mxu0
        %317 = vdwg.mxu0
        %vm318 = vcmask 261120
        %319 = vst.msk [vmem:[%s219] sm:$0xff] %vm318, %v310
        %320 = vst.msk [vmem:[%s219 + $0x8] sm:$0xff] %vm318, %v315
        %s321 = sand.u32 %s113, 1
        %s322 = scalar_lea.sflag [#allocation4], %s321
        %s323 = sand.u32 %s113, 1
        %s324 = smul.addr %s323, 16
        %s325 = scalar_lea.vmem [#allocation7], %s324
        // Predicated region
        $region41: #{tpu_custom_call.1} parent=31 // pred_check
          %p326 = pneg %p123
        $region42: #{tpu_custom_call.1} parent=31 // pred_check_branch
          %328 = sbr.rel (%p326) target = $region44
        $region43: #{tpu_custom_call.1} parent=31 // pred_region
          %s330 = ssub.s32 256, 256
          %331 = vsyncadd %s322, %s330
          %s332 = smul.addr %s26, 2
          %s333 = smul.addr %s25, 8
          %s334 = sadd.s32 %s332, %s333
          %s335 = smul.addr %s334, 128
          %s336 = scalar_lea.hbm %s3, %s335
          %s337 = sshll.u32 %s325, 4
          %s338 = int_to_ptr.vmem [resolvable:$true] %s337
          %343 = dma.vmem_to_hbm [thread:$0]  %s338, 256, %s336, %s322, 128, 128, 8
        $region44: #{tpu_custom_call.1} parent=31 // pred_fallthru
          _
      $region32: #{tpu_custom_call.1} parent=5 // pred_fallthru
        _
      %p344 = scmp.le.s32.totalorder 2, %s16
      // Predicated region
      $region45: #{tpu_custom_call.1} parent=5 // pred_check
        %p345 = pneg %p344
      $region46: #{tpu_custom_call.1} parent=5 // pred_check_branch
        %347 = sbr.rel (%p345) target = $region48
      $region47: #{tpu_custom_call.1} parent=5 // pred_region
        %s348 = ssub.s32 %s16, 2
        // Predicated region
        $region49: #{tpu_custom_call.1} parent=47 // pred_check
          %p349 = pneg %p129
        $region50: #{tpu_custom_call.1} parent=47 // pred_check_branch
          %351 = sbr.rel (%p349) target = $region52
        $region51: #{tpu_custom_call.1} parent=47 // pred_region
          %s352 = sand.u32 %s114, 1
          %s353 = scalar_lea.sflag [#allocation4], %s352
          %s354 = sand.u32 %s114, 1
          %s355 = smul.addr %s354, 16
          %s356 = scalar_lea.vmem [#allocation7], %s355
          %357 = dma.done %s353, 256
        $region52: #{tpu_custom_call.1} parent=47 // pred_fallthru
          _
      $region48: #{tpu_custom_call.1} parent=5 // pred_fallthru
        _
    $region6: #{tpu_custom_call.1} parent=1 // loop_footer
      %s20 = sadd.s32 1, %s16
    $region7: #{tpu_custom_call.1} parent=1 // loop_footer_branch
      %15 = sbr.rel target = $region3
    $region8: #{tpu_custom_call.1} parent=1 // loop_exit
      _
    %358 = vsyncpa [#allocation3], 1
    %s359 = scalar_lea.sflag [#allocation3], 1
    %360 = vsyncpa %s359, 1
    %361 = vsyncpa [#allocation6], 1
    %362 = vsyncpa [#allocation4], 1
    %s363 = scalar_lea.sflag [#allocation4], 1
    %364 = vsyncpa %s363, 1

</llo_original>
